<compile_context>
chip_gen: v6e
topology: v6e:2x2x1
jax: 0.10.0
libtpu: 0.0.40
codegen_flags: <defaults>
</compile_context>

<pallas_src>
import functools

import jax
import jax.numpy as jnp
from jax.experimental import pallas as pl
from jax.experimental.pallas import tpu as pltpu

LANE = 128      # TPU lane width  (last dim)
SUBLANE = 8     # TPU sublane width (second-to-last dim)


def _round_up(x, m):
    return (x + m - 1) // m * m


def _pad2d(a, rows, cols):
    pr, pc = rows - a.shape[0], cols - a.shape[1]
    if pr == 0 and pc == 0:
        return a
    return jnp.pad(a, ((0, pr), (0, pc)))


def _pick_tm(m):
    # Largest row tile up to 1024 rows, multiple of the 8-row sublane.
    # 1024 rows x 128 lanes x 4 B  = 512 KiB per buffer -> far below the
    # 32 MiB scoped VMEM default even on v7x with double buffering.
    return min(1024, _round_up(m, SUBLANE))


# ----------------------------------------------------------------------------
# Kernel 1: fused   project_in -> elementwise fn -> project_out   (one M-tile)
# ----------------------------------------------------------------------------
def _fused_project_kernel(x_ref, w_in_ref, b_in_ref, w_out_ref, b_out_ref,
                          o_ref, *, fn):
    # x_ref:(TM, Din_p) w_in:(Din_p, Dout_p) b_in:(1, Dout_p)
    # w_out:(Dout_p, Din_p) b_out:(1, Din_p) o_ref:(TM, Din_p)
    h = jnp.dot(x_ref[...], w_in_ref[...], preferred_element_type=jnp.float32)
    h = h + b_in_ref[...].astype(jnp.float32)          # f32 epilogue (v5e-safe)
    h = fn(h)                                          # elementwise fn in VMEM
    y = jnp.dot(h.astype(w_out_ref.dtype), w_out_ref[...],
                preferred_element_type=jnp.float32)
    y = y + b_out_ref[...].astype(jnp.float32)
    o_ref[...] = y.astype(o_ref.dtype)


def fused_project_in_out(x2d, w_in, b_in, w_out, b_out, fn, *, tm=None):
    """project_out(fn(project_in(x2d))) in one pallas_call, tiled over rows."""
    M, Din = x2d.shape
    Dout = w_in.shape[1]
    dtype = x2d.dtype

    Din_p = _round_up(Din, LANE)
    Dout_p = _round_up(Dout, LANE)
    TM = tm if tm is not None else _pick_tm(M)
    M_p = _round_up(M, TM)

    # Zero-pad to lane-dense / tile-divisible shapes (exact: padded hidden
    # columns hit zero rows of w_out, padded output columns are sliced away).
    x_p = _pad2d(x2d, M_p, Din_p)
    w_in_p = _pad2d(w_in, Din_p, Dout_p)
    b_in_p = _pad2d(b_in.reshape(1, -1), 1, Dout_p)
    w_out_p = _pad2d(w_out, Dout_p, Din_p)
    b_out_p = _pad2d(b_out.reshape(1, -1), 1, Din_p)

    itemsize = jnp.dtype(dtype).itemsize
    cost = pl.CostEstimate(
        flops=4 * M * Din * Dout,
        transcendentals=M * Dout,
        bytes_accessed=itemsize * (2 * M * Din + 2 * Din * Dout + Din + Dout),
    )

    out = pl.pallas_call(
        functools.partial(_fused_project_kernel, fn=fn),
        out_shape=jax.ShapeDtypeStruct((M_p, Din_p), dtype),
        grid=(M_p // TM,),
        in_specs=[
            pl.BlockSpec((TM, Din_p), lambda i: (i, 0)),
            pl.BlockSpec((Din_p, Dout_p), lambda i: (0, 0)),
            pl.BlockSpec((1, Dout_p), lambda i: (0, 0)),
            pl.BlockSpec((Dout_p, Din_p), lambda i: (0, 0)),
            pl.BlockSpec((1, Din_p), lambda i: (0, 0)),
        ],
        out_specs=pl.BlockSpec((TM, Din_p), lambda i: (i, 0)),
        compiler_params=pltpu.CompilerParams(
            dimension_semantics=("parallel",),
            vmem_limit_bytes=32 * 1024 * 1024,
        ),
        cost_estimate=cost,
    )(x_p, w_in_p, b_in_p, w_out_p, b_out_p)

    return out[:M, :Din]


# ----------------------------------------------------------------------------
# Kernel 2: single Linear (matmul + bias), row-tiled — for opaque `fn`
# ----------------------------------------------------------------------------
def _linear_kernel(x_ref, w_ref, b_ref, o_ref):
    acc = jnp.dot(x_ref[...], w_ref[...], preferred_element_type=jnp.float32)
    o_ref[...] = (acc + b_ref[...].astype(jnp.float32)).astype(o_ref.dtype)


def linear_pallas(x2d, w, b, *, tm=None):
    """y = x2d @ w + b, tiled over rows with lane-dense padded feature dims."""
    M, Din = x2d.shape
    Dout = w.shape[1]
    dtype = x2d.dtype

    Din_p = _round_up(Din, LANE)
    Dout_p = _round_up(Dout, LANE)
    TM = tm if tm is not None else _pick_tm(M)
    M_p = _round_up(M, TM)

    x_p = _pad2d(x2d, M_p, Din_p)
    w_p = _pad2d(w, Din_p, Dout_p)
    b_p = _pad2d(b.reshape(1, -1), 1, Dout_p)

    itemsize = jnp.dtype(dtype).itemsize
    cost = pl.CostEstimate(
        flops=2 * M * Din * Dout,
        transcendentals=0,
        bytes_accessed=itemsize * (M * Din + Din * Dout + M * Dout + Dout),
    )

    out = pl.pallas_call(
        _linear_kernel,
        out_shape=jax.ShapeDtypeStruct((M_p, Dout_p), dtype),
        grid=(M_p // TM,),
        in_specs=[
            pl.BlockSpec((TM, Din_p), lambda i: (i, 0)),
            pl.BlockSpec((Din_p, Dout_p), lambda i: (0, 0)),
            pl.BlockSpec((1, Dout_p), lambda i: (0, 0)),
        ],
        out_specs=pl.BlockSpec((TM, Dout_p), lambda i: (i, 0)),
        compiler_params=pltpu.CompilerParams(
            dimension_semantics=("parallel",),
            vmem_limit_bytes=32 * 1024 * 1024,
        ),
        cost_estimate=cost,
    )(x_p, w_p, b_p)

    return out[:M, :Dout]


# ----------------------------------------------------------------------------
# ProjectInOut module (parameters held in a small dict)
# ----------------------------------------------------------------------------
def init_project_in_out(key, dim_in, dim_out, dtype=jnp.float32):
    """PyTorch-style init: U(-1/sqrt(fan_in), 1/sqrt(fan_in)).

    For v6e/v7x throughput use dtype=jnp.bfloat16 (accumulation stays f32
    inside the kernels); f32 kept here for the exact correctness check.
    """
    params = {"dim_in": dim_in, "dim_out": dim_out}
    if dim_in == dim_out:
        return params  # nn.Identity on both sides
    k1, k2, k3, k4 = jax.random.split(key, 4)
    bound_in = 1.0 / (dim_in ** 0.5)
    bound_out = 1.0 / (dim_out ** 0.5)
    # stored pre-transposed: (fan_in, fan_out) so kernels do x @ W
    params["w_in"] = jax.random.uniform(
        k1, (dim_in, dim_out), dtype, minval=-bound_in, maxval=bound_in)
    params["b_in"] = jax.random.uniform(
        k2, (dim_out,), dtype, minval=-bound_in, maxval=bound_in)
    params["w_out"] = jax.random.uniform(
        k3, (dim_out, dim_in), dtype, minval=-bound_out, maxval=bound_out)
    params["b_out"] = jax.random.uniform(
        k4, (dim_in,), dtype, minval=-bound_out, maxval=bound_out)
    return params


def project_in_out_forward(params, fn, x, *args, fn_is_elementwise=False,
                           **kwargs):
    """Forward pass matching ProjectInOut.forward.

    x: (batch, seq, dim_in); fn: arbitrary JAX callable at dim_out width.
    If `fn_is_elementwise` (and takes no extra args), the whole
    project_in -> fn -> project_out chain runs as ONE fused Pallas kernel.
    """
    B, N, Din = x.shape
    need_projection = params["dim_in"] != params["dim_out"]

    if not need_projection:
        return fn(x, *args, **kwargs)          # Identity on both sides

    if fn_is_elementwise and not args and not kwargs:
        x2d = x.reshape(B * N, Din)
        y2d = fused_project_in_out(
            x2d, params["w_in"], params["b_in"],
            params["w_out"], params["b_out"], fn)
        return y2d.reshape(B, N, Din)

    # Generic path: opaque fn stays outside the kernels.
    x2d = x.reshape(B * N, Din)
    x2d = linear_pallas(x2d, params["w_in"], params["b_in"])
    x = x2d.reshape(B, N, params["dim_out"])
    x = fn(x, *args, **kwargs)
    x2d = x.reshape(B * N, params["dim_out"])
    x2d = linear_pallas(x2d, params["w_out"], params["b_out"])
    return x2d.reshape(B, N, Din)


# ----------------------------------------------------------------------------
# Demo / smoke test
# ----------------------------------------------------------------------------
if __name__ == "__main__":
    key = jax.random.PRNGKey(0)
    k_param, k_x = jax.random.split(key)

    batch, seq, dim_in, dim_out = 2, 8, 32, 64
    params = init_project_in_out(k_param, dim_in, dim_out)
    x = jax.random.normal(k_x, (batch, seq, dim_in), dtype=jnp.float32)

    fn = jnp.tanh  # stand-in for the wrapped sub-module

    # Pure-JAX reference of the same math.
    ref = jnp.tanh(x @ params["w_in"] + params["b_in"]) @ params["w_out"] \
        + params["b_out"]

    # 1) Fused single-kernel path (elementwise fn).
    fwd_fused = jax.jit(functools.partial(
        project_in_out_forward, params, fn, fn_is_elementwise=True))
    y_fused = fwd_fused(x)
    jax.block_until_ready(y_fused)
    assert y_fused.shape == (batch, seq, dim_in)
    assert jnp.allclose(y_fused, ref, atol=1e-5, rtol=1e-5)

    # 2) Generic path (opaque fn): two tiled Pallas linears around fn.
    fwd_generic = jax.jit(functools.partial(project_in_out_forward, params, fn))
    y_generic = fwd_generic(x)
    jax.block_until_ready(y_generic)
    assert jnp.allclose(y_generic, ref, atol=1e-5, rtol=1e-5)

    # 3) Identity path (dim_in == dim_out): module reduces to fn(x).
    params_id = init_project_in_out(k_param, dim_in, dim_in)
    y_id = jax.jit(functools.partial(project_in_out_forward, params_id, fn))(x)
    jax.block_until_ready(y_id)
    assert jnp.allclose(y_id, jnp.tanh(x), atol=1e-6, rtol=1e-6)

    print("KERNEL_OK")
</pallas_src>

<mosaic_0001>
module attributes {stable_mosaic.version = 11 : i64} {
  func.func @_fused_project_kernel(%arg0: i32, %arg1: memref<16x128xf32, #tpu.memory_space<vmem>>, %arg2: memref<128x128xf32, #tpu.memory_space<vmem>>, %arg3: memref<1x128xf32, #tpu.memory_space<vmem>>, %arg4: memref<128x128xf32, #tpu.memory_space<vmem>>, %arg5: memref<1x128xf32, #tpu.memory_space<vmem>>, %arg6: memref<16x128xf32, #tpu.memory_space<vmem>>) attributes {dimension_semantics = [#tpu.dimension_semantics<parallel>], iteration_bounds = array<i64: 1>, scalar_prefetch = 0 : i64, scratch_operands = 0 : i64, tpu.core_type = #tpu.core_type<tc>, window_params = [{transform_indices = @transform_0, window_bounds = array<i64: 16, 128>}, {pipeline_mode = #tpu.pipeline_mode<synchronous>, transform_indices = @transform_1, window_bounds = array<i64: 128, 128>}, {pipeline_mode = #tpu.pipeline_mode<synchronous>, transform_indices = @transform_2, window_bounds = array<i64: 1, 128>}, {pipeline_mode = #tpu.pipeline_mode<synchronous>, transform_indices = @transform_3, window_bounds = array<i64: 128, 128>}, {pipeline_mode = #tpu.pipeline_mode<synchronous>, transform_indices = @transform_4, window_bounds = array<i64: 1, 128>}, {transform_indices = @transform_5, window_bounds = array<i64: 16, 128>}]} {
    %c0 = arith.constant 0 : index
    %c0_0 = arith.constant 0 : index
    %0 = vector.load %arg1[%c0, %c0_0] : memref<16x128xf32, #tpu.memory_space<vmem>>, vector<16x128xf32>
    %c0_1 = arith.constant 0 : index
    %c0_2 = arith.constant 0 : index
    %1 = vector.load %arg2[%c0_1, %c0_2] : memref<128x128xf32, #tpu.memory_space<vmem>>, vector<128x128xf32>
    %cst = arith.constant dense<0.000000e+00> : vector<16x128xf32>
    %2 = tpu.matmul %0, %1, %cst {dimension_numbers = #tpu.dot_dimension_numbers<[1], [0], [0], [1], [0, 0, 1, 1], [], []>} : vector<16x128xf32>, vector<128x128xf32>, vector<16x128xf32> -> vector<16x128xf32>
    %c0_3 = arith.constant 0 : index
    %c0_4 = arith.constant 0 : index
    %3 = vector.load %arg3[%c0_3, %c0_4] : memref<1x128xf32, #tpu.memory_space<vmem>>, vector<1x128xf32>
    %4 = vector.broadcast %3 : vector<1x128xf32> to vector<16x128xf32>
    %5 = arith.addf %2, %4 : vector<16x128xf32>
    %6 = math.tanh %5 : vector<16x128xf32>
    %c0_5 = arith.constant 0 : index
    %c0_6 = arith.constant 0 : index
    %7 = vector.load %arg4[%c0_5, %c0_6] : memref<128x128xf32, #tpu.memory_space<vmem>>, vector<128x128xf32>
    %cst_7 = arith.constant dense<0.000000e+00> : vector<16x128xf32>
    %8 = tpu.matmul %6, %7, %cst_7 {dimension_numbers = #tpu.dot_dimension_numbers<[1], [0], [0], [1], [0, 0, 1, 1], [], []>} : vector<16x128xf32>, vector<128x128xf32>, vector<16x128xf32> -> vector<16x128xf32>
    %c0_8 = arith.constant 0 : index
    %c0_9 = arith.constant 0 : index
    %9 = vector.load %arg5[%c0_8, %c0_9] : memref<1x128xf32, #tpu.memory_space<vmem>>, vector<1x128xf32>
    %10 = vector.broadcast %9 : vector<1x128xf32> to vector<16x128xf32>
    %11 = arith.addf %8, %10 : vector<16x128xf32>
    %c0_10 = arith.constant 0 : index
    %c0_11 = arith.constant 0 : index
    %12 = vector.load %arg6[%c0_10, %c0_11] : memref<16x128xf32, #tpu.memory_space<vmem>>, vector<16x128xf32>
    tpu.vector_store %arg6[%c0_10, %c0_11], %11 {strides = array<i32>} : memref<16x128xf32, #tpu.memory_space<vmem>>, vector<16x128xf32>,
    return
  }
  func.func @transform_0(%arg0: i32) -> (i32, i32) {
    %c0_i32 = arith.constant 0 : i32
    %c0_i32_0 = arith.constant 0 : i32
    return %arg0, %c0_i32 : i32, i32
  }
  func.func @transform_1(%arg0: i32) -> (i32, i32) {
    %c0_i32 = arith.constant 0 : i32
    %c0_i32_0 = arith.constant 0 : i32
    %c0_i32_1 = arith.constant 0 : i32
    return %c0_i32, %c0_i32_0 : i32, i32
  }
  func.func @transform_2(%arg0: i32) -> (i32, i32) {
    %c0_i32 = arith.constant 0 : i32
    %c0_i32_0 = arith.constant 0 : i32
    %c0_i32_1 = arith.constant 0 : i32
    return %c0_i32, %c0_i32_0 : i32, i32
  }
  func.func @transform_3(%arg0: i32) -> (i32, i32) {
    %c0_i32 = arith.constant 0 : i32
    %c0_i32_0 = arith.constant 0 : i32
    %c0_i32_1 = arith.constant 0 : i32
    return %c0_i32, %c0_i32_0 : i32, i32
  }
  func.func @transform_4(%arg0: i32) -> (i32, i32) {
    %c0_i32 = arith.constant 0 : i32
    %c0_i32_0 = arith.constant 0 : i32
    %c0_i32_1 = arith.constant 0 : i32
    return %c0_i32, %c0_i32_0 : i32, i32
  }
  func.func @transform_5(%arg0: i32) -> (i32, i32) {
    %c0_i32 = arith.constant 0 : i32
    %c0_i32_0 = arith.constant 0 : i32
    return %arg0, %c0_i32 : i32, i32
  }
}

</mosaic_0001>

<llo_original>
// kernel: project_in_out_forward.1
$region0: #{project_in_out_forward.1}
  #allocation0 [shape = 'u32[]', space=smem, size = 0x4, offset = 0x4, fixed_abs, tag = 'smem constant byte address 0x4 - core index']
  #allocation1 [shape = 'u32[144,128]{1,0:T(1,128)}', space=vmem, size = 0x12000, scoped, tag = 'internal scratch']
  %s0 = inlined_call_operand.vmem [shape: f32[16,128], index: 0, kind: input, shape index: {}]
  %s1 = inlined_call_operand.hbm [shape: f32[128,128], index: 1, kind: input, shape index: {}]
  %s2 = inlined_call_operand.vmem [shape: f32[1,128], index: 2, kind: input, shape index: {}]
  %s3 = inlined_call_operand.hbm [shape: f32[128,128], index: 3, kind: input, shape index: {}]
  %s4 = inlined_call_operand.vmem [shape: f32[1,128], index: 4, kind: input, shape index: {}]
  %s5 = inlined_call_operand.vmem [shape: f32[16,128], index: 5, kind: output, shape index: {}]
  %s6 = sld [smem:[#allocation0]]
  $region38: #{project_in_out_forward.1} parent=0
    _
  %s8 = ssub.s32 1, %s6
  %s9 = scalar_select 0, %s8, %s6
  $region1: #{project_in_out_forward.1} parent=0
    #allocation2 [shape = 'u8[65536]{0}', space=vmem, size = 0x10000, scoped, tag = 'input window, operand 1, single buffered']
    #allocation3 [shape = 's32[1]{0}', space=sflag, size = 0x4, scoped, tag = 'scoped memory for project_in_out_forward.1']
    #allocation4 [shape = 'u8[65536]{0}', space=vmem, size = 0x10000, scoped, tag = 'input window, operand 3, single buffered']
    #allocation5 [shape = 's32[1]{0}', space=sflag, size = 0x4, scoped, tag = 'scoped memory for project_in_out_forward.1']
    %10 = vsyncpa [#allocation3], 0
    %11 = vsyncpa [#allocation5], 0
    // Predicated region
    $region2: #{project_in_out_forward.1} parent=1 // pred_check
      _
    $region3: #{project_in_out_forward.1} parent=1 // pred_check_branch
      %13 = sbr.rel (0) target = $region5
    $region4: #{project_in_out_forward.1} parent=1 // pred_region
      _
    $region5: #{project_in_out_forward.1} parent=1 // pred_fallthru
      _
    // Predicated region
    $region6: #{project_in_out_forward.1} parent=1 // pred_check
      _
    $region7: #{project_in_out_forward.1} parent=1 // pred_check_branch
      %15 = sbr.rel (0) target = $region9
    $region8: #{project_in_out_forward.1} parent=1 // pred_region
      %s17 = ssub.s32 2048, 2048
      %18 = vsyncadd [#allocation3], %s17
      %s19 = sshll.u32 [#allocation2], 4
      %s20 = int_to_ptr.vmem [resolvable:$true] %s19
      %25 = dma.hbm_to_vmem [thread:$0]  %s1, 2048, %s20, [#allocation3], 128, 128, 8
    $region9: #{project_in_out_forward.1} parent=1 // pred_fallthru
      _
    // Predicated region
    $region10: #{project_in_out_forward.1} parent=1 // pred_check
      _
    $region11: #{project_in_out_forward.1} parent=1 // pred_check_branch
      %27 = sbr.rel (0) target = $region13
    $region12: #{project_in_out_forward.1} parent=1 // pred_region
      _
    $region13: #{project_in_out_forward.1} parent=1 // pred_fallthru
      _
    // Predicated region
    $region14: #{project_in_out_forward.1} parent=1 // pred_check
      _
    $region15: #{project_in_out_forward.1} parent=1 // pred_check_branch
      %29 = sbr.rel (0) target = $region17
    $region16: #{project_in_out_forward.1} parent=1 // pred_region
      %s31 = ssub.s32 2048, 2048
      %32 = vsyncadd [#allocation5], %s31
      %s33 = sshll.u32 [#allocation4], 4
      %s34 = int_to_ptr.vmem [resolvable:$true] %s33
      %39 = dma.hbm_to_vmem [thread:$0]  %s3, 2048, %s34, [#allocation5], 128, 128, 8
    $region17: #{project_in_out_forward.1} parent=1 // pred_fallthru
      _
    // Predicated region
    $region18: #{project_in_out_forward.1} parent=1 // pred_check
      _
    $region19: #{project_in_out_forward.1} parent=1 // pred_check_branch
      %41 = sbr.rel (0) target = $region21
    $region20: #{project_in_out_forward.1} parent=1 // pred_region
      _
    $region21: #{project_in_out_forward.1} parent=1 // pred_fallthru
      _
    // Predicated region
    $region22: #{project_in_out_forward.1} parent=1 // pred_check
      _
    $region23: #{project_in_out_forward.1} parent=1 // pred_check_branch
      %43 = sbr.rel (0) target = $region25
    $region24: #{project_in_out_forward.1} parent=1 // pred_region
      %44 = dma.done [#allocation3], 2048
    $region25: #{project_in_out_forward.1} parent=1 // pred_fallthru
      _
    // Predicated region
    $region26: #{project_in_out_forward.1} parent=1 // pred_check
      _
    $region27: #{project_in_out_forward.1} parent=1 // pred_check_branch
      %46 = sbr.rel (0) target = $region29
    $region28: #{project_in_out_forward.1} parent=1 // pred_region
      %47 = dma.done [#allocation5], 2048
    $region29: #{project_in_out_forward.1} parent=1 // pred_fallthru
      _
    %v48 = vld [vmem:[%s0] sm:$0xff]
    %v49 = vld [vmem:[%s0 + $0x8] sm:$0xff]
    %v50 = vld [vmem:[#allocation2] sm:$0xff]
    %v51 = vld [vmem:[#allocation2 + $0x8] sm:$0xff]
    %v52 = vld [vmem:[#allocation2 + $0x10] sm:$0xff]
    %v53 = vld [vmem:[#allocation2 + $0x18] sm:$0xff]
    %v54 = vld [vmem:[#allocation2 + $0x20] sm:$0xff]
    %v55 = vld [vmem:[#allocation2 + $0x28] sm:$0xff]
    %v56 = vld [vmem:[#allocation2 + $0x30] sm:$0xff]
    %v57 = vld [vmem:[#allocation2 + $0x38] sm:$0xff]
    %v58 = vld [vmem:[#allocation2 + $0x40] sm:$0xff]
    %v59 = vld [vmem:[#allocation2 + $0x48] sm:$0xff]
    %v60 = vld [vmem:[#allocation2 + $0x50] sm:$0xff]
    %v61 = vld [vmem:[#allocation2 + $0x58] sm:$0xff]
    %v62 = vld [vmem:[#allocation2 + $0x60] sm:$0xff]
    %v63 = vld [vmem:[#allocation2 + $0x68] sm:$0xff]
    %v64 = vld [vmem:[#allocation2 + $0x70] sm:$0xff]
    %v65 = vld [vmem:[#allocation2 + $0x78] sm:$0xff]
    %v66 = vld [vmem:[%s2] sm:$0x1]
    %v68 = vlaneseq
    %v69 = vshrl.u32 %v68, 7
    %v70 = vsub.s32 0, %v69
    %v71 = vrot.slane %v66, %v70
    %73 = vmatprep.subr.mxu0 0.0
    %74 = vmatpush1.msra.mxu0 %v65
    %75 = vmatprep.subr.mxu0 0.0
    %76 = vmatpush1.msra.mxu0 %v64
    %77 = vmatprep.subr.mxu0 0.0
    %78 = vmatpush1.msra.mxu0 %v63
    %79 = vmatprep.subr.mxu0 0.0
    %80 = vmatpush1.msra.mxu0 %v62
    %81 = vmatprep.subr.mxu0 0.0
    %82 = vmatpush1.msra.mxu0 %v61
    %83 = vmatprep.subr.mxu0 0.0
    %84 = vmatpush1.msra.mxu0 %v60
    %85 = vmatprep.subr.mxu0 0.0
    %86 = vmatpush1.msra.mxu0 %v59
    %87 = vmatprep.subr.mxu0 0.0
    %88 = vmatpush1.msra.mxu0 %v58
    %89 = vmatprep.subr.mxu0 0.0
    %90 = vmatpush1.msra.mxu0 %v57
    %91 = vmatprep.subr.mxu0 0.0
    %92 = vmatpush1.msra.mxu0 %v56
    %93 = vmatprep.subr.mxu0 0.0
    %94 = vmatpush1.msra.mxu0 %v55
    %95 = vmatprep.subr.mxu0 0.0
    %96 = vmatpush1.msra.mxu0 %v54
    %97 = vmatprep.subr.mxu0 0.0
    %98 = vmatpush1.msra.mxu0 %v53
    %99 = vmatprep.subr.mxu0 0.0
    %100 = vmatpush1.msra.mxu0 %v52
    %101 = vmatprep.subr.mxu0 0.0
    %102 = vmatpush1.msra.mxu0 %v51
    %103 = vmatprep.subr.mxu0 0.0
    %104 = vmatpush1.msra.mxu0 %v50
    %105 = vmatprep.subr.mxu0 0.0
    %106 = vmatpush2.msra.mxu0 0.0
    %107 = vmatprep.subr.mxu0 0.0
    %108 = vmatpush2.msra.mxu0 0.0
    %109 = vmatprep.subr.mxu0 0.0
    %110 = vmatpush2.msra.mxu0 0.0
    %111 = vmatprep.subr.mxu0 0.0
    %112 = vmatpush2.msra.mxu0 0.0
    %113 = vmatprep.subr.mxu0 0.0
    %114 = vmatpush2.msra.mxu0 0.0
    %115 = vmatprep.subr.mxu0 0.0
    %116 = vmatpush2.msra.mxu0 0.0
    %117 = vmatprep.subr.mxu0 0.0
    %118 = vmatpush2.msra.mxu0 0.0
    %119 = vmatprep.subr.mxu0 0.0
    %120 = vmatpush2.msra.mxu0 0.0
    %121 = vmatprep.subr.mxu0 0.0
    %122 = vmatpush2.msra.mxu0 0.0
    %123 = vmatprep.subr.mxu0 0.0
    %124 = vmatpush2.msra.mxu0 0.0
    %125 = vmatprep.subr.mxu0 0.0
    %126 = vmatpush2.msra.mxu0 0.0
    %127 = vmatprep.subr.mxu0 0.0
    %128 = vmatpush2.msra.mxu0 0.0
    %129 = vmatprep.subr.mxu0 0.0
    %130 = vmatpush2.msra.mxu0 0.0
    %131 = vmatprep.subr.mxu0 0.0
    %132 = vmatpush2.msra.mxu0 0.0
    %133 = vmatprep.subr.mxu0 0.0
    %134 = vmatpush2.msra.mxu0 0.0
    %135 = vmatprep.subr.mxu0 0.0
    %136 = vmatpush2.msra.mxu0 0.0
    %137 = vmatprep.mubr.f32.mxu0 0.0
    %138 = vmatmul.mubr.f32.gmra.mxu0 %v48
    %v139 = vpop.f32.mrf.mxu0
    %v140 = vadd.f32 %v71, %v139
    %v141 = vpop.f32.mrf.mxu0
    %142 = vmatprep.mubr.f32.mxu0 0.0
    %143 = vmatmul.mubr.f32.gmra.mxu0 %v49
    %v144 = vpop.f32.mrf.mxu0
    %v145 = vadd.f32 %v71, %v144
    %v146 = vpop.f32.mrf.mxu0
    %147 = vdwg.mxu0
    %v148 = vtanh.pop %v140
    %v149 = vtanh.pop %v145
    %v150 = vld [vmem:[#allocation4] sm:$0xff]
    %v151 = vld [vmem:[#allocation4 + $0x8] sm:$0xff]
    %v152 = vld [vmem:[#allocation4 + $0x10] sm:$0xff]
    %v153 = vld [vmem:[#allocation4 + $0x18] sm:$0xff]
    %v154 = vld [vmem:[#allocation4 + $0x20] sm:$0xff]
    %v155 = vld [vmem:[#allocation4 + $0x28] sm:$0xff]
    %v156 = vld [vmem:[#allocation4 + $0x30] sm:$0xff]
    %v157 = vld [vmem:[#allocation4 + $0x38] sm:$0xff]
    %v158 = vld [vmem:[#allocation4 + $0x40] sm:$0xff]
    %v159 = vld [vmem:[#allocation4 + $0x48] sm:$0xff]
    %v160 = vld [vmem:[#allocation4 + $0x50] sm:$0xff]
    %v161 = vld [vmem:[#allocation4 + $0x58] sm:$0xff]
    %v162 = vld [vmem:[#allocation4 + $0x60] sm:$0xff]
    %v163 = vld [vmem:[#allocation4 + $0x68] sm:$0xff]
    %v164 = vld [vmem:[#allocation4 + $0x70] sm:$0xff]
    %v165 = vld [vmem:[#allocation4 + $0x78] sm:$0xff]
    %v166 = vld [vmem:[%s4] sm:$0x1]
    %v168 = vlaneseq
    %v169 = vshrl.u32 %v168, 7
    %v170 = vsub.s32 0, %v169
    %v171 = vrot.slane %v166, %v170
    %173 = vmatprep.subr.mxu0 0.0
    %174 = vmatpush1.msra.mxu0 %v165
    %175 = vmatprep.subr.mxu0 0.0
    %176 = vmatpush1.msra.mxu0 %v164
    %177 = vmatprep.subr.mxu0 0.0
    %178 = vmatpush1.msra.mxu0 %v163
    %179 = vmatprep.subr.mxu0 0.0
    %180 = vmatpush1.msra.mxu0 %v162
    %181 = vmatprep.subr.mxu0 0.0
    %182 = vmatpush1.msra.mxu0 %v161
    %183 = vmatprep.subr.mxu0 0.0
    %184 = vmatpush1.msra.mxu0 %v160
    %185 = vmatprep.subr.mxu0 0.0
    %186 = vmatpush1.msra.mxu0 %v159
    %187 = vmatprep.subr.mxu0 0.0
    %188 = vmatpush1.msra.mxu0 %v158
    %189 = vmatprep.subr.mxu0 0.0
    %190 = vmatpush1.msra.mxu0 %v157
    %191 = vmatprep.subr.mxu0 0.0
    %192 = vmatpush1.msra.mxu0 %v156
    %193 = vmatprep.subr.mxu0 0.0
    %194 = vmatpush1.msra.mxu0 %v155
    %195 = vmatprep.subr.mxu0 0.0
    %196 = vmatpush1.msra.mxu0 %v154
    %197 = vmatprep.subr.mxu0 0.0
    %198 = vmatpush1.msra.mxu0 %v153
    %199 = vmatprep.subr.mxu0 0.0
    %200 = vmatpush1.msra.mxu0 %v152
    %201 = vmatprep.subr.mxu0 0.0
    %202 = vmatpush1.msra.mxu0 %v151
    %203 = vmatprep.subr.mxu0 0.0
    %204 = vmatpush1.msra.mxu0 %v150
    %205 = vmatprep.subr.mxu0 0.0
    %206 = vmatpush2.msra.mxu0 0.0
    %207 = vmatprep.subr.mxu0 0.0
    %208 = vmatpush2.msra.mxu0 0.0
    %209 = vmatprep.subr.mxu0 0.0
    %210 = vmatpush2.msra.mxu0 0.0
    %211 = vmatprep.subr.mxu0 0.0
    %212 = vmatpush2.msra.mxu0 0.0
    %213 = vmatprep.subr.mxu0 0.0
    %214 = vmatpush2.msra.mxu0 0.0
    %215 = vmatprep.subr.mxu0 0.0
    %216 = vmatpush2.msra.mxu0 0.0
    %217 = vmatprep.subr.mxu0 0.0
    %218 = vmatpush2.msra.mxu0 0.0
    %219 = vmatprep.subr.mxu0 0.0
    %220 = vmatpush2.msra.mxu0 0.0
    %221 = vmatprep.subr.mxu0 0.0
    %222 = vmatpush2.msra.mxu0 0.0
    %223 = vmatprep.subr.mxu0 0.0
    %224 = vmatpush2.msra.mxu0 0.0
    %225 = vmatprep.subr.mxu0 0.0
    %226 = vmatpush2.msra.mxu0 0.0
    %227 = vmatprep.subr.mxu0 0.0
    %228 = vmatpush2.msra.mxu0 0.0
    %229 = vmatprep.subr.mxu0 0.0
    %230 = vmatpush2.msra.mxu0 0.0
    %231 = vmatprep.subr.mxu0 0.0
    %232 = vmatpush2.msra.mxu0 0.0
    %233 = vmatprep.subr.mxu0 0.0
    %234 = vmatpush2.msra.mxu0 0.0
    %235 = vmatprep.subr.mxu0 0.0
    %236 = vmatpush2.msra.mxu0 0.0
    %237 = vmatprep.mubr.f32.mxu0 0.0
    %238 = vmatmul.mubr.f32.gmra.mxu0 %v148
    %v239 = vpop.f32.mrf.mxu0
    %v240 = vadd.f32 %v171, %v239
    %v241 = vpop.f32.mrf.mxu0
    %242 = vmatprep.mubr.f32.mxu0 0.0
    %243 = vmatmul.mubr.f32.gmra.mxu0 %v149
    %v244 = vpop.f32.mrf.mxu0
    %v245 = vadd.f32 %v171, %v244
    %v246 = vpop.f32.mrf.mxu0
    %247 = vdwg.mxu0
    %248 = vst [vmem:[%s5] sm:$0xff] %v240
    %249 = vst [vmem:[%s5 + $0x8] sm:$0xff] %v245
    // Predicated region
    $region30: #{project_in_out_forward.1} parent=1 // pred_check
      _
    $region31: #{project_in_out_forward.1} parent=1 // pred_check_branch
      %251 = sbr.rel (0) target = $region33
    $region32: #{project_in_out_forward.1} parent=1 // pred_region
      _
    $region33: #{project_in_out_forward.1} parent=1 // pred_fallthru
      _
    // Predicated region
    $region34: #{project_in_out_forward.1} parent=1 // pred_check
      _
    $region35: #{project_in_out_forward.1} parent=1 // pred_check_branch
      %253 = sbr.rel (0) target = $region37
    $region36: #{project_in_out_forward.1} parent=1 // pred_region
      _
    $region37: #{project_in_out_forward.1} parent=1 // pred_fallthru
      _
    %254 = vsyncpa [#allocation3], 1
    %255 = vsyncpa [#allocation5], 1

</llo_original>
